<compile_context>
chip_gen: v6e
topology: v6e:2x2x1
jax: 0.10.0
libtpu: 0.0.40
codegen_flags: <defaults>
</compile_context>

<pallas_src>
import functools

import jax
import jax.numpy as jnp
from jax.experimental import pallas as pl
from jax.experimental.pallas import tpu as pltpu

_LANE = 128


def _round_up(n, m):
    return (n + m - 1) // m * m


def _pad_axis(a, axis, multiple):
    pad = (-a.shape[axis]) % multiple
    if pad == 0:
        return a
    widths = [(0, 0)] * a.ndim
    widths[axis] = (0, pad)
    return jnp.pad(a, widths)


def normalize_adjacency(A):
    """A: (R, N, N), A[r, i, j] = 1 iff edge i->j for relation r.
    Returns bf16 A_hat with A_hat[r, j, i] = A[r, i, j]/sqrt(d_in[j] d_out[i]),
    degrees clamped to >= 1 (DGL GraphConv norm='both')."""
    deg_out = jnp.maximum(A.sum(axis=2), 1.0)  # (R, N) source out-degree
    deg_in = jnp.maximum(A.sum(axis=1), 1.0)   # (R, N) destination in-degree
    At = jnp.swapaxes(A, 1, 2)                 # (R, N_dst, N_src)
    A_hat = (At
             * (1.0 / jnp.sqrt(deg_in))[:, :, None]
             * (1.0 / jnp.sqrt(deg_out))[:, None, :])
    return A_hat.astype(jnp.bfloat16)          # bf16 stream, f32 accumulation in-kernel


# ----------------------------------------------------------------------------
# Fused kernel: both layers in one launch (small-graph regime).
# ----------------------------------------------------------------------------
def _rgcn_fused_kernel(adj_ref, x_ref, w1_ref, b1_ref, w6_ref, b6_ref, o_ref):
    n_rel = adj_ref.shape[0]
    n_p = x_ref.shape[0]
    f_hid = w1_ref.shape[2]
    f_out = w6_ref.shape[2]

    x_bf = x_ref[...].astype(jnp.bfloat16)

    # Layer 1: aggregate-first association (A_r @ X) @ W1_r  (F_in <= F_hid).
    h = jnp.zeros((n_p, f_hid), jnp.float32)
    for r in range(n_rel):
        agg = jnp.dot(adj_ref[r], x_bf, preferred_element_type=jnp.float32)
        h = h + jnp.dot(agg, w1_ref[r], preferred_element_type=jnp.float32)
    h = jnp.maximum(h + b1_ref[...], 0.0)      # f32 epilogue on the accumulator

    # Layer 2: transform-first association A_r @ (h @ W6_r)  (F_out <= F_hid).
    out = jnp.zeros((n_p, f_out), jnp.float32)
    for r in range(n_rel):
        hw = jnp.dot(h, w6_ref[r],
                     preferred_element_type=jnp.float32).astype(jnp.bfloat16)
        out = out + jnp.dot(adj_ref[r], hw, preferred_element_type=jnp.float32)

    o_ref[...] = (out + b6_ref[...]).astype(o_ref.dtype)


def _rgcn_fused(adj_p, x_p, w1_p, b1s, w6_p, b6s):
    R, Np, _ = adj_p.shape
    f_in = x_p.shape[1]
    f_hid = w1_p.shape[2]
    f_out = w6_p.shape[2]
    return pl.pallas_call(
        _rgcn_fused_kernel,
        out_shape=jax.ShapeDtypeStruct((Np, f_out), jnp.float32),
        grid_spec=pltpu.PrefetchScalarGridSpec(
            num_scalar_prefetch=0,
            grid=(1,),
            in_specs=[
                pl.BlockSpec((R, Np, Np), lambda i: (0, 0, 0)),      # A_hat (bf16)
                pl.BlockSpec((Np, f_in), lambda i: (0, 0)),          # X
                pl.BlockSpec((R, f_in, f_hid), lambda i: (0, 0, 0)), # W1
                pl.BlockSpec((1, f_hid), lambda i: (0, 0)),          # sum_r b1_r
                pl.BlockSpec((R, f_hid, f_out), lambda i: (0, 0, 0)),# W6
                pl.BlockSpec((1, f_out), lambda i: (0, 0)),          # sum_r b6_r
            ],
            out_specs=pl.BlockSpec((Np, f_out), lambda i: (0, 0)),
        ),
        compiler_params=pltpu.CompilerParams(
            dimension_semantics=("arbitrary",),
            vmem_limit_bytes=32 * 1024 * 1024,
        ),
    )(adj_p, x_p, w1_p, b1s, w6_p, b6s)


# ----------------------------------------------------------------------------
# Tiled path (large-graph regime): XW precompute + node-tiled aggregation.
# ----------------------------------------------------------------------------
def _xw_kernel(x_ref, w_ref, o_ref):
    o_ref[...] = jnp.dot(x_ref[...], w_ref[...],
                         preferred_element_type=jnp.float32).astype(o_ref.dtype)


def _xw_all(x_p, w_p, *, tn=128):
    """XW[r] = X @ W_r, hoisted out of the adjacency tile loop. bf16 output."""
    Np, f_in = x_p.shape
    R, _, f_out = w_p.shape
    return pl.pallas_call(
        _xw_kernel,
        out_shape=jax.ShapeDtypeStruct((R, Np, f_out), jnp.bfloat16),
        grid_spec=pltpu.PrefetchScalarGridSpec(
            num_scalar_prefetch=0,
            grid=(Np // tn, R),
            in_specs=[
                pl.BlockSpec((tn, f_in), lambda i, r: (i, 0)),
                pl.BlockSpec((None, f_in, f_out), lambda i, r: (r, 0, 0)),
            ],
            out_specs=pl.BlockSpec((None, tn, f_out), lambda i, r: (r, i, 0)),
        ),
        compiler_params=pltpu.CompilerParams(
            dimension_semantics=("parallel", "arbitrary"),
            vmem_limit_bytes=32 * 1024 * 1024,
        ),
    )(x_p, w_p)


def _rgcn_layer_tiled_kernel(adj_ref, xw_ref, bsum_ref, o_ref, acc_ref, *, apply_relu):
    r = pl.program_id(1)
    k = pl.program_id(2)

    @pl.when((r == 0) & (k == 0))
    def _():
        # Fold the relation-summed bias into the accumulator init.
        acc_ref[...] = jnp.broadcast_to(bsum_ref[...], acc_ref.shape)

    # bf16 x bf16 MXU tile, f32 accumulation.
    acc_ref[...] += jnp.dot(adj_ref[...], xw_ref[...],
                            preferred_element_type=jnp.float32)

    @pl.when((r == pl.num_programs(1) - 1) & (k == pl.num_programs(2) - 1))
    def _():
        y = acc_ref[...]
        if apply_relu:
            y = jnp.maximum(y, 0.0)          # f32 epilogue (v5e-safe), cast at store
        o_ref[...] = y.astype(o_ref.dtype)


def _rgcn_layer_tiled(adj_p, x_p, w_p, bsum, *, apply_relu, tm=128, tk=128):
    R, Np, _ = adj_p.shape
    f_out = w_p.shape[2]
    xw = _xw_all(x_p, w_p)                    # (R, Np, f_out) bf16
    return pl.pallas_call(
        functools.partial(_rgcn_layer_tiled_kernel, apply_relu=apply_relu),
        out_shape=jax.ShapeDtypeStruct((Np, f_out), jnp.float32),
        grid_spec=pltpu.PrefetchScalarGridSpec(
            num_scalar_prefetch=0,
            grid=(Np // tm, R, Np // tk),     # (dst tile, relation, src tile)
            in_specs=[
                pl.BlockSpec((None, tm, tk), lambda i, r, k: (r, i, k)),    # A_hat tile
                pl.BlockSpec((None, tk, f_out), lambda i, r, k: (r, k, 0)), # XW_r tile
                pl.BlockSpec((1, f_out), lambda i, r, k: (0, 0)),           # summed bias
            ],
            out_specs=pl.BlockSpec((tm, f_out), lambda i, r, k: (i, 0)),
            scratch_shapes=[pltpu.VMEM((tm, f_out), jnp.float32)],
        ),
        compiler_params=pltpu.CompilerParams(
            # dst tiles shard across TensorCores (2 TCs on v7x); relation/src
            # axes are the reduction.
            dimension_semantics=("parallel", "arbitrary", "arbitrary"),
            vmem_limit_bytes=32 * 1024 * 1024,
        ),
    )(adj_p, xw, bsum)


# ----------------------------------------------------------------------------
# Forward wrapper (padding, path selection).
# ----------------------------------------------------------------------------
@functools.partial(jax.jit, static_argnames=("fuse", "node_tile"))
def rgcn_forward(adj_hat, x, params, *, fuse=None, node_tile=128):
    """adj_hat: (R, N, N) normalized adjacency (dst-major, bf16 or f32).
       x: (N, F_in). params: W1 (R,F_in,H), b1 (R,H), W6 (R,H,F_out), b6 (R,F_out)."""
    R, N, _ = adj_hat.shape
    f_out = params["W6"].shape[2]

    adj = adj_hat.astype(jnp.bfloat16)

    # Lane-dense feature layout: pad every feature dim to a multiple of 128.
    x_p = _pad_axis(x.astype(jnp.float32), 1, _LANE)
    w1_p = _pad_axis(_pad_axis(params["W1"].astype(jnp.float32), 1, _LANE), 2, _LANE)
    w6_p = _pad_axis(_pad_axis(params["W6"].astype(jnp.float32), 1, _LANE), 2, _LANE)
    # Biases of all relations sum linearly; fold them once per layer.
    b1s = jnp.sum(_pad_axis(params["b1"].astype(jnp.float32), 1, _LANE), 0, keepdims=True)
    b6s = jnp.sum(_pad_axis(params["b6"].astype(jnp.float32), 1, _LANE), 0, keepdims=True)

    if fuse is None:
        # Fused path keeps the whole bf16 adjacency + activations VMEM resident;
        # budget against the smallest chip (v7x: 64 MiB physical / 32 MiB scoped).
        n8 = _round_up(N, 8)
        fused_bytes = (R * n8 * n8 * 2            # adjacency (bf16)
                       + 3 * n8 * _LANE * 4       # x / h / out
                       + 2 * R * _LANE * _LANE * 4)
        fuse = fused_bytes <= 4 * 1024 * 1024

    if fuse:
        Np = _round_up(N, 8)
        adj_pp = _pad_axis(_pad_axis(adj, 1, 8), 2, 8)
        x_pp = _pad_axis(x_p, 0, 8)
        out = _rgcn_fused(adj_pp, x_pp, w1_p, b1s, w6_p, b6s)
    else:
        Np = _round_up(N, node_tile)
        adj_pp = _pad_axis(_pad_axis(adj, 1, node_tile), 2, node_tile)
        x_pp = _pad_axis(x_p, 0, node_tile)
        h = _rgcn_layer_tiled(adj_pp, x_pp, w1_p, b1s, apply_relu=True,
                              tm=node_tile, tk=node_tile)
        out = _rgcn_layer_tiled(adj_pp, h, w6_p, b6s, apply_relu=False,
                                tm=node_tile, tk=node_tile)

    return out[:N, :f_out]


def rgcn_forward_ref(adj_hat, x, params):
    """Pure-JAX (f32) reference."""
    adj = adj_hat.astype(jnp.float32)

    def layer(xx, W, b):
        y = jnp.zeros((xx.shape[0], W.shape[2]), jnp.float32)
        for r in range(W.shape[0]):
            y = y + adj[r] @ (xx @ W[r]) + b[r]
        return y

    h = jnp.maximum(layer(x, params["W1"], params["b1"]), 0.0)
    return layer(h, params["W6"], params["b6"])


def _make_problem(key, N, R, in_f, hid_f, out_f, p_edge):
    ks = jax.random.split(key, 6)
    A = (jax.random.uniform(ks[0], (R, N, N)) < p_edge).astype(jnp.float32)
    adj_hat = normalize_adjacency(A)
    x = jax.random.normal(ks[1], (N, in_f), jnp.float32)

    def glorot(k, shape):
        fan_in, fan_out = shape[-2], shape[-1]
        lim = (6.0 / (fan_in + fan_out)) ** 0.5
        return jax.random.uniform(k, shape, jnp.float32, -lim, lim)

    params = {
        "W1": glorot(ks[2], (R, in_f, hid_f)),
        "b1": 0.01 * jax.random.normal(ks[3], (R, hid_f), jnp.float32),
        "W6": glorot(ks[4], (R, hid_f, out_f)),
        "b6": 0.01 * jax.random.normal(ks[5], (R, out_f), jnp.float32),
    }
    return adj_hat, x, params


if __name__ == "__main__":
    key = jax.random.PRNGKey(0)
    k_small, k_big = jax.random.split(key)

    # Small graph (module's toy sizes) -> fused single-launch path.
    adj_hat, x, params = _make_problem(k_small, N=16, R=3,
                                       in_f=8, hid_f=32, out_f=16, p_edge=0.25)
    out = jax.block_until_ready(rgcn_forward(adj_hat, x, params))
    ref = rgcn_forward_ref(adj_hat, x, params)
    assert out.shape == ref.shape
    assert jnp.allclose(out, ref, atol=3e-2, rtol=3e-2), \
        float(jnp.max(jnp.abs(out - ref)))

    # Larger graph (non-multiple-of-128 node count) -> node-tiled, parallel path.
    adj2, x2, params2 = _make_problem(k_big, N=300, R=3,
                                      in_f=8, hid_f=32, out_f=16, p_edge=0.05)
    out2 = jax.block_until_ready(rgcn_forward(adj2, x2, params2, fuse=False))
    ref2 = rgcn_forward_ref(adj2, x2, params2)
    assert out2.shape == ref2.shape
    assert jnp.allclose(out2, ref2, atol=3e-2, rtol=3e-2), \
        float(jnp.max(jnp.abs(out2 - ref2)))

    print("KERNEL_OK")
</pallas_src>

<mosaic_0001>
module attributes {stable_mosaic.version = 11 : i64} {
  func.func @_rgcn_fused_kernel(%arg0: i32, %arg1: memref<3x16x16xbf16, #tpu.memory_space<vmem>>, %arg2: memref<16x128xf32, #tpu.memory_space<vmem>>, %arg3: memref<3x128x128xf32, #tpu.memory_space<vmem>>, %arg4: memref<1x128xf32, #tpu.memory_space<vmem>>, %arg5: memref<3x128x128xf32, #tpu.memory_space<vmem>>, %arg6: memref<1x128xf32, #tpu.memory_space<vmem>>, %arg7: memref<16x128xf32, #tpu.memory_space<vmem>>) attributes {dimension_semantics = [#tpu.dimension_semantics<arbitrary>], iteration_bounds = array<i64: 1>, scalar_prefetch = 0 : i64, scratch_operands = 0 : i64, tpu.core_type = #tpu.core_type<tc>, window_params = [{pipeline_mode = #tpu.pipeline_mode<synchronous>, transform_indices = @transform_0, window_bounds = array<i64: 3, 16, 16>}, {pipeline_mode = #tpu.pipeline_mode<synchronous>, transform_indices = @transform_1, window_bounds = array<i64: 16, 128>}, {pipeline_mode = #tpu.pipeline_mode<synchronous>, transform_indices = @transform_2, window_bounds = array<i64: 3, 128, 128>}, {pipeline_mode = #tpu.pipeline_mode<synchronous>, transform_indices = @transform_3, window_bounds = array<i64: 1, 128>}, {pipeline_mode = #tpu.pipeline_mode<synchronous>, transform_indices = @transform_4, window_bounds = array<i64: 3, 128, 128>}, {pipeline_mode = #tpu.pipeline_mode<synchronous>, transform_indices = @transform_5, window_bounds = array<i64: 1, 128>}, {pipeline_mode = #tpu.pipeline_mode<synchronous>, transform_indices = @transform_6, window_bounds = array<i64: 16, 128>}]} {
    %c0 = arith.constant 0 : index
    %c0_0 = arith.constant 0 : index
    %0 = vector.load %arg2[%c0, %c0_0] : memref<16x128xf32, #tpu.memory_space<vmem>>, vector<16x128xf32>
    %1 = arith.truncf %0 : vector<16x128xf32> to vector<16x128xbf16>
    %cst = arith.constant 0.000000e+00 : f32
    %2 = vector.broadcast %cst : f32 to vector<16x128xf32>
    %c0_1 = arith.constant 0 : index
    %c0_2 = arith.constant 0 : index
    %c0_3 = arith.constant 0 : index
    %3 = vector.load %arg1[%c0_1, %c0_2, %c0_3] : memref<3x16x16xbf16, #tpu.memory_space<vmem>>, vector<1x16x16xbf16>
    %4 = vector.shape_cast %3 : vector<1x16x16xbf16> to vector<16x16xbf16>
    %cst_4 = arith.constant dense<0.000000e+00> : vector<16x128xf32>
    %5 = tpu.matmul %4, %1, %cst_4 {dimension_numbers = #tpu.dot_dimension_numbers<[1], [0], [0], [1], [0, 0, 1, 1], [], []>} : vector<16x16xbf16>, vector<16x128xbf16>, vector<16x128xf32> -> vector<16x128xf32>
    %c0_5 = arith.constant 0 : index
    %c0_6 = arith.constant 0 : index
    %c0_7 = arith.constant 0 : index
    %6 = vector.load %arg3[%c0_5, %c0_6, %c0_7] : memref<3x128x128xf32, #tpu.memory_space<vmem>>, vector<1x128x128xf32>
    %7 = vector.shape_cast %6 : vector<1x128x128xf32> to vector<128x128xf32>
    %cst_8 = arith.constant dense<0.000000e+00> : vector<16x128xf32>
    %8 = tpu.matmul %5, %7, %cst_8 {dimension_numbers = #tpu.dot_dimension_numbers<[1], [0], [0], [1], [0, 0, 1, 1], [], []>} : vector<16x128xf32>, vector<128x128xf32>, vector<16x128xf32> -> vector<16x128xf32>
    %9 = arith.addf %2, %8 : vector<16x128xf32>
    %c1 = arith.constant 1 : index
    %c0_9 = arith.constant 0 : index
    %c0_10 = arith.constant 0 : index
    %10 = vector.load %arg1[%c1, %c0_9, %c0_10] : memref<3x16x16xbf16, #tpu.memory_space<vmem>>, vector<1x16x16xbf16>
    %11 = vector.shape_cast %10 : vector<1x16x16xbf16> to vector<16x16xbf16>
    %cst_11 = arith.constant dense<0.000000e+00> : vector<16x128xf32>
    %12 = tpu.matmul %11, %1, %cst_11 {dimension_numbers = #tpu.dot_dimension_numbers<[1], [0], [0], [1], [0, 0, 1, 1], [], []>} : vector<16x16xbf16>, vector<16x128xbf16>, vector<16x128xf32> -> vector<16x128xf32>
    %c1_12 = arith.constant 1 : index
    %c0_13 = arith.constant 0 : index
    %c0_14 = arith.constant 0 : index
    %13 = vector.load %arg3[%c1_12, %c0_13, %c0_14] : memref<3x128x128xf32, #tpu.memory_space<vmem>>, vector<1x128x128xf32>
    %14 = vector.shape_cast %13 : vector<1x128x128xf32> to vector<128x128xf32>
    %cst_15 = arith.constant dense<0.000000e+00> : vector<16x128xf32>
    %15 = tpu.matmul %12, %14, %cst_15 {dimension_numbers = #tpu.dot_dimension_numbers<[1], [0], [0], [1], [0, 0, 1, 1], [], []>} : vector<16x128xf32>, vector<128x128xf32>, vector<16x128xf32> -> vector<16x128xf32>
    %16 = arith.addf %9, %15 : vector<16x128xf32>
    %c2 = arith.constant 2 : index
    %c0_16 = arith.constant 0 : index
    %c0_17 = arith.constant 0 : index
    %17 = vector.load %arg1[%c2, %c0_16, %c0_17] : memref<3x16x16xbf16, #tpu.memory_space<vmem>>, vector<1x16x16xbf16>
    %18 = vector.shape_cast %17 : vector<1x16x16xbf16> to vector<16x16xbf16>
    %cst_18 = arith.constant dense<0.000000e+00> : vector<16x128xf32>
    %19 = tpu.matmul %18, %1, %cst_18 {dimension_numbers = #tpu.dot_dimension_numbers<[1], [0], [0], [1], [0, 0, 1, 1], [], []>} : vector<16x16xbf16>, vector<16x128xbf16>, vector<16x128xf32> -> vector<16x128xf32>
    %c2_19 = arith.constant 2 : index
    %c0_20 = arith.constant 0 : index
    %c0_21 = arith.constant 0 : index
    %20 = vector.load %arg3[%c2_19, %c0_20, %c0_21] : memref<3x128x128xf32, #tpu.memory_space<vmem>>, vector<1x128x128xf32>
    %21 = vector.shape_cast %20 : vector<1x128x128xf32> to vector<128x128xf32>
    %cst_22 = arith.constant dense<0.000000e+00> : vector<16x128xf32>
    %22 = tpu.matmul %19, %21, %cst_22 {dimension_numbers = #tpu.dot_dimension_numbers<[1], [0], [0], [1], [0, 0, 1, 1], [], []>} : vector<16x128xf32>, vector<128x128xf32>, vector<16x128xf32> -> vector<16x128xf32>
    %23 = arith.addf %16, %22 : vector<16x128xf32>
    %c0_23 = arith.constant 0 : index
    %c0_24 = arith.constant 0 : index
    %24 = vector.load %arg4[%c0_23, %c0_24] : memref<1x128xf32, #tpu.memory_space<vmem>>, vector<1x128xf32>
    %25 = vector.broadcast %24 : vector<1x128xf32> to vector<16x128xf32>
    %26 = arith.addf %23, %25 : vector<16x128xf32>
    %cst_25 = arith.constant 0.000000e+00 : f32
    %27 = vector.broadcast %cst_25 : f32 to vector<16x128xf32>
    %28 = arith.maximumf %26, %27 : vector<16x128xf32>
    %cst_26 = arith.constant 0.000000e+00 : f32
    %29 = vector.broadcast %cst_26 : f32 to vector<16x128xf32>
    %c0_27 = arith.constant 0 : index
    %c0_28 = arith.constant 0 : index
    %c0_29 = arith.constant 0 : index
    %30 = vector.load %arg5[%c0_27, %c0_28, %c0_29] : memref<3x128x128xf32, #tpu.memory_space<vmem>>, vector<1x128x128xf32>
    %31 = vector.shape_cast %30 : vector<1x128x128xf32> to vector<128x128xf32>
    %cst_30 = arith.constant dense<0.000000e+00> : vector<16x128xf32>
    %32 = tpu.matmul %28, %31, %cst_30 {dimension_numbers = #tpu.dot_dimension_numbers<[1], [0], [0], [1], [0, 0, 1, 1], [], []>} : vector<16x128xf32>, vector<128x128xf32>, vector<16x128xf32> -> vector<16x128xf32>
    %33 = arith.truncf %32 : vector<16x128xf32> to vector<16x128xbf16>
    %c0_31 = arith.constant 0 : index
    %c0_32 = arith.constant 0 : index
    %c0_33 = arith.constant 0 : index
    %34 = vector.load %arg1[%c0_31, %c0_32, %c0_33] : memref<3x16x16xbf16, #tpu.memory_space<vmem>>, vector<1x16x16xbf16>
    %35 = vector.shape_cast %34 : vector<1x16x16xbf16> to vector<16x16xbf16>
    %cst_34 = arith.constant dense<0.000000e+00> : vector<16x128xf32>
    %36 = tpu.matmul %35, %33, %cst_34 {dimension_numbers = #tpu.dot_dimension_numbers<[1], [0], [0], [1], [0, 0, 1, 1], [], []>} : vector<16x16xbf16>, vector<16x128xbf16>, vector<16x128xf32> -> vector<16x128xf32>
    %37 = arith.addf %29, %36 : vector<16x128xf32>
    %c1_35 = arith.constant 1 : index
    %c0_36 = arith.constant 0 : index
    %c0_37 = arith.constant 0 : index
    %38 = vector.load %arg5[%c1_35, %c0_36, %c0_37] : memref<3x128x128xf32, #tpu.memory_space<vmem>>, vector<1x128x128xf32>
    %39 = vector.shape_cast %38 : vector<1x128x128xf32> to vector<128x128xf32>
    %cst_38 = arith.constant dense<0.000000e+00> : vector<16x128xf32>
    %40 = tpu.matmul %28, %39, %cst_38 {dimension_numbers = #tpu.dot_dimension_numbers<[1], [0], [0], [1], [0, 0, 1, 1], [], []>} : vector<16x128xf32>, vector<128x128xf32>, vector<16x128xf32> -> vector<16x128xf32>
    %41 = arith.truncf %40 : vector<16x128xf32> to vector<16x128xbf16>
    %c1_39 = arith.constant 1 : index
    %c0_40 = arith.constant 0 : index
    %c0_41 = arith.constant 0 : index
    %42 = vector.load %arg1[%c1_39, %c0_40, %c0_41] : memref<3x16x16xbf16, #tpu.memory_space<vmem>>, vector<1x16x16xbf16>
    %43 = vector.shape_cast %42 : vector<1x16x16xbf16> to vector<16x16xbf16>
    %cst_42 = arith.constant dense<0.000000e+00> : vector<16x128xf32>
    %44 = tpu.matmul %43, %41, %cst_42 {dimension_numbers = #tpu.dot_dimension_numbers<[1], [0], [0], [1], [0, 0, 1, 1], [], []>} : vector<16x16xbf16>, vector<16x128xbf16>, vector<16x128xf32> -> vector<16x128xf32>
    %45 = arith.addf %37, %44 : vector<16x128xf32>
    %c2_43 = arith.constant 2 : index
    %c0_44 = arith.constant 0 : index
    %c0_45 = arith.constant 0 : index
    %46 = vector.load %arg5[%c2_43, %c0_44, %c0_45] : memref<3x128x128xf32, #tpu.memory_space<vmem>>, vector<1x128x128xf32>
    %47 = vector.shape_cast %46 : vector<1x128x128xf32> to vector<128x128xf32>
    %cst_46 = arith.constant dense<0.000000e+00> : vector<16x128xf32>
    %48 = tpu.matmul %28, %47, %cst_46 {dimension_numbers = #tpu.dot_dimension_numbers<[1], [0], [0], [1], [0, 0, 1, 1], [], []>} : vector<16x128xf32>, vector<128x128xf32>, vector<16x128xf32> -> vector<16x128xf32>
    %49 = arith.truncf %48 : vector<16x128xf32> to vector<16x128xbf16>
    %c2_47 = arith.constant 2 : index
    %c0_48 = arith.constant 0 : index
    %c0_49 = arith.constant 0 : index
    %50 = vector.load %arg1[%c2_47, %c0_48, %c0_49] : memref<3x16x16xbf16, #tpu.memory_space<vmem>>, vector<1x16x16xbf16>
    %51 = vector.shape_cast %50 : vector<1x16x16xbf16> to vector<16x16xbf16>
    %cst_50 = arith.constant dense<0.000000e+00> : vector<16x128xf32>
    %52 = tpu.matmul %51, %49, %cst_50 {dimension_numbers = #tpu.dot_dimension_numbers<[1], [0], [0], [1], [0, 0, 1, 1], [], []>} : vector<16x16xbf16>, vector<16x128xbf16>, vector<16x128xf32> -> vector<16x128xf32>
    %53 = arith.addf %45, %52 : vector<16x128xf32>
    %c0_51 = arith.constant 0 : index
    %c0_52 = arith.constant 0 : index
    %54 = vector.load %arg6[%c0_51, %c0_52] : memref<1x128xf32, #tpu.memory_space<vmem>>, vector<1x128xf32>
    %55 = vector.broadcast %54 : vector<1x128xf32> to vector<16x128xf32>
    %56 = arith.addf %53, %55 : vector<16x128xf32>
    %c0_53 = arith.constant 0 : index
    %c0_54 = arith.constant 0 : index
    %57 = vector.load %arg7[%c0_53, %c0_54] : memref<16x128xf32, #tpu.memory_space<vmem>>, vector<16x128xf32>
    tpu.vector_store %arg7[%c0_53, %c0_54], %56 {strides = array<i32>} : memref<16x128xf32, #tpu.memory_space<vmem>>, vector<16x128xf32>,
    return
  }
  func.func @transform_0(%arg0: i32) -> (i32, i32, i32) {
    %c0_i32 = arith.constant 0 : i32
    %c0_i32_0 = arith.constant 0 : i32
    %c0_i32_1 = arith.constant 0 : i32
    %c0_i32_2 = arith.constant 0 : i32
    return %c0_i32, %c0_i32_0, %c0_i32_1 : i32, i32, i32
  }
  func.func @transform_1(%arg0: i32) -> (i32, i32) {
    %c0_i32 = arith.constant 0 : i32
    %c0_i32_0 = arith.constant 0 : i32
    %c0_i32_1 = arith.constant 0 : i32
    return %c0_i32, %c0_i32_0 : i32, i32
  }
  func.func @transform_2(%arg0: i32) -> (i32, i32, i32) {
    %c0_i32 = arith.constant 0 : i32
    %c0_i32_0 = arith.constant 0 : i32
    %c0_i32_1 = arith.constant 0 : i32
    %c0_i32_2 = arith.constant 0 : i32
    return %c0_i32, %c0_i32_0, %c0_i32_1 : i32, i32, i32
  }
  func.func @transform_3(%arg0: i32) -> (i32, i32) {
    %c0_i32 = arith.constant 0 : i32
    %c0_i32_0 = arith.constant 0 : i32
    %c0_i32_1 = arith.constant 0 : i32
    return %c0_i32, %c0_i32_0 : i32, i32
  }
  func.func @transform_4(%arg0: i32) -> (i32, i32, i32) {
    %c0_i32 = arith.constant 0 : i32
    %c0_i32_0 = arith.constant 0 : i32
    %c0_i32_1 = arith.constant 0 : i32
    %c0_i32_2 = arith.constant 0 : i32
    return %c0_i32, %c0_i32_0, %c0_i32_1 : i32, i32, i32
  }
  func.func @transform_5(%arg0: i32) -> (i32, i32) {
    %c0_i32 = arith.constant 0 : i32
    %c0_i32_0 = arith.constant 0 : i32
    %c0_i32_1 = arith.constant 0 : i32
    return %c0_i32, %c0_i32_0 : i32, i32
  }
  func.func @transform_6(%arg0: i32) -> (i32, i32) {
    %c0_i32 = arith.constant 0 : i32
    %c0_i32_0 = arith.constant 0 : i32
    %c0_i32_1 = arith.constant 0 : i32
    return %c0_i32, %c0_i32_0 : i32, i32
  }
}

</mosaic_0001>

<llo_original>
// kernel: rgcn_forward.1
$region0: #{rgcn_forward.1}
  #allocation0 [shape = 'u32[]', space=smem, size = 0x4, offset = 0x4, fixed_abs, tag = 'smem constant byte address 0x4 - core index']
  #allocation1 [shape = 'u32[144,128]{1,0:T(1,128)}', space=vmem, size = 0x12000, scoped, tag = 'internal scratch']
  %s0 = inlined_call_operand.vmem [shape: bf16[3,16,16], index: 0, kind: input, shape index: {}]
  %s1 = inlined_call_operand.vmem [shape: f32[16,128], index: 1, kind: input, shape index: {}]
  %s2 = inlined_call_operand.vmem [shape: f32[3,128,128], index: 2, kind: input, shape index: {}]
  %s3 = inlined_call_operand.vmem [shape: f32[1,128], index: 3, kind: input, shape index: {}]
  %s4 = inlined_call_operand.vmem [shape: f32[3,128,128], index: 4, kind: input, shape index: {}]
  %s5 = inlined_call_operand.vmem [shape: f32[1,128], index: 5, kind: input, shape index: {}]
  %s6 = inlined_call_operand.hbm [shape: f32[16,128], index: 6, kind: output, shape index: {}]
  %s7 = sld [smem:[#allocation0]]
  $region34: #{rgcn_forward.1} parent=0
    _
  %s9 = ssub.s32 1, %s7
  %s10 = scalar_select 0, %s9, %s7
  $region1: #{rgcn_forward.1} parent=0
    #allocation2 [shape = 'u8[8192]{0}', space=vmem, size = 0x2000, scoped, tag = 'output window, operand 0, single buffered']
    #allocation3 [shape = 's32[1]{0}', space=sflag, size = 0x4, scoped, tag = 'scoped memory for rgcn_forward.1']
    %11 = vsyncpa [#allocation3], 0
    // Predicated region
    $region2: #{rgcn_forward.1} parent=1 // pred_check
      _
    $region3: #{rgcn_forward.1} parent=1 // pred_check_branch
      %13 = sbr.rel (0) target = $region5
    $region4: #{rgcn_forward.1} parent=1 // pred_region
      _
    $region5: #{rgcn_forward.1} parent=1 // pred_fallthru
      _
    // Predicated region
    $region6: #{rgcn_forward.1} parent=1 // pred_check
      _
    $region7: #{rgcn_forward.1} parent=1 // pred_check_branch
      %15 = sbr.rel (0) target = $region9
    $region8: #{rgcn_forward.1} parent=1 // pred_region
      _
    $region9: #{rgcn_forward.1} parent=1 // pred_fallthru
      _
    // Predicated region
    $region10: #{rgcn_forward.1} parent=1 // pred_check
      _
    $region11: #{rgcn_forward.1} parent=1 // pred_check_branch
      %17 = sbr.rel (0) target = $region13
    $region12: #{rgcn_forward.1} parent=1 // pred_region
      _
    $region13: #{rgcn_forward.1} parent=1 // pred_fallthru
      _
    // Predicated region
    $region14: #{rgcn_forward.1} parent=1 // pred_check
      _
    $region15: #{rgcn_forward.1} parent=1 // pred_check_branch
      %19 = sbr.rel (0) target = $region17
    $region16: #{rgcn_forward.1} parent=1 // pred_region
      _
    $region17: #{rgcn_forward.1} parent=1 // pred_fallthru
      _
    // Predicated region
    $region18: #{rgcn_forward.1} parent=1 // pred_check
      _
    $region19: #{rgcn_forward.1} parent=1 // pred_check_branch
      %21 = sbr.rel (0) target = $region21
    $region20: #{rgcn_forward.1} parent=1 // pred_region
      _
    $region21: #{rgcn_forward.1} parent=1 // pred_fallthru
      _
    // Predicated region
    $region22: #{rgcn_forward.1} parent=1 // pred_check
      _
    $region23: #{rgcn_forward.1} parent=1 // pred_check_branch
      %23 = sbr.rel (0) target = $region25
    $region24: #{rgcn_forward.1} parent=1 // pred_region
      _
    $region25: #{rgcn_forward.1} parent=1 // pred_fallthru
      _
    %v25 = vld [vmem:[%s1] sm:$0xff]
    %v26 = vld [vmem:[%s1 + $0x8] sm:$0xff]
    %v27 = vpack.c.bf16 %v26, %v25
    %v28 = vld [vmem:[%s0] sm:$0xf]
    %v29 = vld [vmem:[%s0 + $0x4] sm:$0xf]
    %v32 = vunpack.c.l.b16 %v28
    %v33 = vunpack.c.l.b16 %v29
    %v34 = vpack.c.b16 %v33, %v32
    %vm35 = vcmask 130048
    %v37 = vsel %vm35, %v34, 0
    %39 = vmatprep.subr.bf16.mxu0 0
    %40 = vmatpush1.bf16.msra.mxu0 0
    %41 = vmatprep.subr.bf16.mxu0 0
    %42 = vmatpush1.bf16.msra.mxu0 0
    %43 = vmatprep.subr.bf16.mxu0 0
    %44 = vmatpush1.bf16.msra.mxu0 0
    %45 = vmatprep.subr.bf16.mxu0 0
    %46 = vmatpush1.bf16.msra.mxu0 0
    %47 = vmatprep.subr.bf16.mxu0 0
    %48 = vmatpush1.bf16.msra.mxu0 0
    %49 = vmatprep.subr.bf16.mxu0 0
    %50 = vmatpush1.bf16.msra.mxu0 0
    %51 = vmatprep.subr.bf16.mxu0 0
    %52 = vmatpush1.bf16.msra.mxu0 0
    %53 = vmatprep.subr.bf16.mxu0 0
    %54 = vmatpush1.bf16.msra.mxu0 %v27
    %55 = vmatprep.subr.bf16.mxu0 0
    %56 = vmatpush2.bf16.msra.mxu0 0
    %57 = vmatprep.subr.bf16.mxu0 0
    %58 = vmatpush2.bf16.msra.mxu0 0
    %59 = vmatprep.subr.bf16.mxu0 0
    %60 = vmatpush2.bf16.msra.mxu0 0
    %61 = vmatprep.subr.bf16.mxu0 0
    %62 = vmatpush2.bf16.msra.mxu0 0
    %63 = vmatprep.subr.bf16.mxu0 0
    %64 = vmatpush2.bf16.msra.mxu0 0
    %65 = vmatprep.subr.bf16.mxu0 0
    %66 = vmatpush2.bf16.msra.mxu0 0
    %67 = vmatprep.subr.bf16.mxu0 0
    %68 = vmatpush2.bf16.msra.mxu0 0
    %69 = vmatprep.subr.bf16.mxu0 0
    %70 = vmatpush2.bf16.msra.mxu0 0
    %71 = vmatprep.mubr.bf16.mxu0 0
    %72 = vmatmul.mubr.bf16.gmra.mxu0 %v37
    %v73 = vpop.f32.mrf.mxu0
    %v74 = vadd.f32 0.0, %v73
    %v75 = vpop.f32.mrf.mxu0
    %v76 = vpop.f32.mrf.mxu0
    %v77 = vadd.f32 0.0, %v76
    %v78 = vpop.f32.mrf.mxu0
    %79 = vdwg.mxu0
    %v80 = vld [vmem:[%s2] sm:$0xff]
    %v81 = vld [vmem:[%s2 + $0x8] sm:$0xff]
    %v82 = vld [vmem:[%s2 + $0x10] sm:$0xff]
    %v83 = vld [vmem:[%s2 + $0x18] sm:$0xff]
    %v84 = vld [vmem:[%s2 + $0x20] sm:$0xff]
    %v85 = vld [vmem:[%s2 + $0x28] sm:$0xff]
    %v86 = vld [vmem:[%s2 + $0x30] sm:$0xff]
    %v87 = vld [vmem:[%s2 + $0x38] sm:$0xff]
    %v88 = vld [vmem:[%s2 + $0x40] sm:$0xff]
    %v89 = vld [vmem:[%s2 + $0x48] sm:$0xff]
    %v90 = vld [vmem:[%s2 + $0x50] sm:$0xff]
    %v91 = vld [vmem:[%s2 + $0x58] sm:$0xff]
    %v92 = vld [vmem:[%s2 + $0x60] sm:$0xff]
    %v93 = vld [vmem:[%s2 + $0x68] sm:$0xff]
    %v94 = vld [vmem:[%s2 + $0x70] sm:$0xff]
    %v95 = vld [vmem:[%s2 + $0x78] sm:$0xff]
    %s96 = scalar_lea.vmem %s0, 8
    %v97 = vld [vmem:[%s96] sm:$0xf]
    %v98 = vld [vmem:[%s96 + $0x4] sm:$0xf]
    %v101 = vunpack.c.l.b16 %v97
    %v102 = vunpack.c.l.b16 %v98
    %v103 = vpack.c.b16 %v102, %v101
    %v105 = vsel %vm35, %v103, 0
    %107 = vmatprep.subr.bf16.mxu0 0
    %108 = vmatpush1.bf16.msra.mxu0 0
    %109 = vmatprep.subr.bf16.mxu0 0
    %110 = vmatpush1.bf16.msra.mxu0 0
    %111 = vmatprep.subr.bf16.mxu0 0
    %112 = vmatpush1.bf16.msra.mxu0 0
    %113 = vmatprep.subr.bf16.mxu0 0
    %114 = vmatpush1.bf16.msra.mxu0 0
    %115 = vmatprep.subr.bf16.mxu0 0
    %116 = vmatpush1.bf16.msra.mxu0 0
    %117 = vmatprep.subr.bf16.mxu0 0
    %118 = vmatpush1.bf16.msra.mxu0 0
    %119 = vmatprep.subr.bf16.mxu0 0
    %120 = vmatpush1.bf16.msra.mxu0 0
    %121 = vmatprep.subr.bf16.mxu0 0
    %122 = vmatpush1.bf16.msra.mxu0 %v27
    %123 = vmatprep.subr.bf16.mxu0 0
    %124 = vmatpush2.bf16.msra.mxu0 0
    %125 = vmatprep.subr.bf16.mxu0 0
    %126 = vmatpush2.bf16.msra.mxu0 0
    %127 = vmatprep.subr.bf16.mxu0 0
    %128 = vmatpush2.bf16.msra.mxu0 0
    %129 = vmatprep.subr.bf16.mxu0 0
    %130 = vmatpush2.bf16.msra.mxu0 0
    %131 = vmatprep.subr.bf16.mxu0 0
    %132 = vmatpush2.bf16.msra.mxu0 0
    %133 = vmatprep.subr.bf16.mxu0 0
    %134 = vmatpush2.bf16.msra.mxu0 0
    %135 = vmatprep.subr.bf16.mxu0 0
    %136 = vmatpush2.bf16.msra.mxu0 0
    %137 = vmatprep.subr.bf16.mxu0 0
    %138 = vmatpush2.bf16.msra.mxu0 0
    %139 = vmatprep.mubr.bf16.mxu0 0
    %140 = vmatmul.mubr.bf16.gmra.mxu0 %v105
    %v141 = vpop.f32.mrf.mxu0
    %v142 = vadd.f32 0.0, %v141
    %v143 = vpop.f32.mrf.mxu0
    %v144 = vpop.f32.mrf.mxu0
    %v145 = vadd.f32 0.0, %v144
    %v146 = vpop.f32.mrf.mxu0
    %147 = vdwg.mxu0
    %s148 = scalar_lea.vmem %s2, 128
    %v149 = vld [vmem:[%s148] sm:$0xff]
    %v150 = vld [vmem:[%s148 + $0x8] sm:$0xff]
    %v151 = vld [vmem:[%s148 + $0x10] sm:$0xff]
    %v152 = vld [vmem:[%s148 + $0x18] sm:$0xff]
    %v153 = vld [vmem:[%s148 + $0x20] sm:$0xff]
    %v154 = vld [vmem:[%s148 + $0x28] sm:$0xff]
    %v155 = vld [vmem:[%s148 + $0x30] sm:$0xff]
    %v156 = vld [vmem:[%s148 + $0x38] sm:$0xff]
    %v157 = vld [vmem:[%s148 + $0x40] sm:$0xff]
    %v158 = vld [vmem:[%s148 + $0x48] sm:$0xff]
    %v159 = vld [vmem:[%s148 + $0x50] sm:$0xff]
    %v160 = vld [vmem:[%s148 + $0x58] sm:$0xff]
    %v161 = vld [vmem:[%s148 + $0x60] sm:$0xff]
    %v162 = vld [vmem:[%s148 + $0x68] sm:$0xff]
    %v163 = vld [vmem:[%s148 + $0x70] sm:$0xff]
    %v164 = vld [vmem:[%s148 + $0x78] sm:$0xff]
    %165 = vmatprep.subr.mxu0 0.0
    %166 = vmatpush1.msra.mxu0 %v164
    %167 = vmatprep.subr.mxu0 0.0
    %168 = vmatpush1.msra.mxu0 %v163
    %169 = vmatprep.subr.mxu0 0.0
    %170 = vmatpush1.msra.mxu0 %v162
    %171 = vmatprep.subr.mxu0 0.0
    %172 = vmatpush1.msra.mxu0 %v161
    %173 = vmatprep.subr.mxu0 0.0
    %174 = vmatpush1.msra.mxu0 %v160
    %175 = vmatprep.subr.mxu0 0.0
    %176 = vmatpush1.msra.mxu0 %v159
    %177 = vmatprep.subr.mxu0 0.0
    %178 = vmatpush1.msra.mxu0 %v158
    %179 = vmatprep.subr.mxu0 0.0
    %180 = vmatpush1.msra.mxu0 %v157
    %181 = vmatprep.subr.mxu0 0.0
    %182 = vmatpush1.msra.mxu0 %v156
    %183 = vmatprep.subr.mxu0 0.0
    %184 = vmatpush1.msra.mxu0 %v155
    %185 = vmatprep.subr.mxu0 0.0
    %186 = vmatpush1.msra.mxu0 %v154
    %187 = vmatprep.subr.mxu0 0.0
    %188 = vmatpush1.msra.mxu0 %v153
    %189 = vmatprep.subr.mxu0 0.0
    %190 = vmatpush1.msra.mxu0 %v152
    %191 = vmatprep.subr.mxu0 0.0
    %192 = vmatpush1.msra.mxu0 %v151
    %193 = vmatprep.subr.mxu0 0.0
    %194 = vmatpush1.msra.mxu0 %v150
    %195 = vmatprep.subr.mxu0 0.0
    %196 = vmatpush1.msra.mxu0 %v149
    %197 = vmatprep.subr.mxu0 0.0
    %198 = vmatpush2.msra.mxu0 0.0
    %199 = vmatprep.subr.mxu0 0.0
    %200 = vmatpush2.msra.mxu0 0.0
    %201 = vmatprep.subr.mxu0 0.0
    %202 = vmatpush2.msra.mxu0 0.0
    %203 = vmatprep.subr.mxu0 0.0
    %204 = vmatpush2.msra.mxu0 0.0
    %205 = vmatprep.subr.mxu0 0.0
    %206 = vmatpush2.msra.mxu0 0.0
    %207 = vmatprep.subr.mxu0 0.0
    %208 = vmatpush2.msra.mxu0 0.0
    %209 = vmatprep.subr.mxu0 0.0
    %210 = vmatpush2.msra.mxu0 0.0
    %211 = vmatprep.subr.mxu0 0.0
    %212 = vmatpush2.msra.mxu0 0.0
    %213 = vmatprep.subr.mxu0 0.0
    %214 = vmatpush2.msra.mxu0 0.0
    %215 = vmatprep.subr.mxu0 0.0
    %216 = vmatpush2.msra.mxu0 0.0
    %217 = vmatprep.subr.mxu0 0.0
    %218 = vmatpush2.msra.mxu0 0.0
    %219 = vmatprep.subr.mxu0 0.0
    %220 = vmatpush2.msra.mxu0 0.0
    %221 = vmatprep.subr.mxu0 0.0
    %222 = vmatpush2.msra.mxu0 0.0
    %223 = vmatprep.subr.mxu0 0.0
    %224 = vmatpush2.msra.mxu0 0.0
    %225 = vmatprep.subr.mxu0 0.0
    %226 = vmatpush2.msra.mxu0 0.0
    %227 = vmatprep.subr.mxu0 0.0
    %228 = vmatpush2.msra.mxu0 0.0
    %229 = vmatprep.mubr.f32.mxu0 0.0
    %230 = vmatmul.mubr.f32.gmra.mxu0 %v142
    %v231 = vpop.f32.mrf.mxu0
    %v232 = vadd.f32 0.0, %v231
    %v233 = vpop.f32.mrf.mxu0
    %234 = vmatprep.mubr.f32.mxu0 0.0
    %235 = vmatmul.mubr.f32.gmra.mxu0 %v145
    %v236 = vpop.f32.mrf.mxu0
    %v237 = vadd.f32 0.0, %v236
    %v238 = vpop.f32.mrf.mxu0
    %239 = vdwg.mxu0
    %240 = vmatprep.subr.mxu0 0.0
    %241 = vmatpush1.msra.mxu0 %v95
    %242 = vmatprep.subr.mxu0 0.0
    %243 = vmatpush1.msra.mxu0 %v94
    %244 = vmatprep.subr.mxu0 0.0
    %245 = vmatpush1.msra.mxu0 %v93
    %246 = vmatprep.subr.mxu0 0.0
    %247 = vmatpush1.msra.mxu0 %v92
    %248 = vmatprep.subr.mxu0 0.0
    %249 = vmatpush1.msra.mxu0 %v91
    %250 = vmatprep.subr.mxu0 0.0
    %251 = vmatpush1.msra.mxu0 %v90
    %252 = vmatprep.subr.mxu0 0.0
    %253 = vmatpush1.msra.mxu0 %v89
    %254 = vmatprep.subr.mxu0 0.0
    %255 = vmatpush1.msra.mxu0 %v88
    %256 = vmatprep.subr.mxu0 0.0
    %257 = vmatpush1.msra.mxu0 %v87
    %258 = vmatprep.subr.mxu0 0.0
    %259 = vmatpush1.msra.mxu0 %v86
    %260 = vmatprep.subr.mxu0 0.0
    %261 = vmatpush1.msra.mxu0 %v85
    %262 = vmatprep.subr.mxu0 0.0
    %263 = vmatpush1.msra.mxu0 %v84
    %264 = vmatprep.subr.mxu0 0.0
    %265 = vmatpush1.msra.mxu0 %v83
    %266 = vmatprep.subr.mxu0 0.0
    %267 = vmatpush1.msra.mxu0 %v82
    %268 = vmatprep.subr.mxu0 0.0
    %269 = vmatpush1.msra.mxu0 %v81
    %270 = vmatprep.subr.mxu0 0.0
    %271 = vmatpush1.msra.mxu0 %v80
    %272 = vmatprep.subr.mxu0 0.0
    %273 = vmatpush2.msra.mxu0 0.0
    %274 = vmatprep.subr.mxu0 0.0
    %275 = vmatpush2.msra.mxu0 0.0
    %276 = vmatprep.subr.mxu0 0.0
    %277 = vmatpush2.msra.mxu0 0.0
    %278 = vmatprep.subr.mxu0 0.0
    %279 = vmatpush2.msra.mxu0 0.0
    %280 = vmatprep.subr.mxu0 0.0
    %281 = vmatpush2.msra.mxu0 0.0
    %282 = vmatprep.subr.mxu0 0.0
    %283 = vmatpush2.msra.mxu0 0.0
    %284 = vmatprep.subr.mxu0 0.0
    %285 = vmatpush2.msra.mxu0 0.0
    %286 = vmatprep.subr.mxu0 0.0
    %287 = vmatpush2.msra.mxu0 0.0
    %288 = vmatprep.subr.mxu0 0.0
    %289 = vmatpush2.msra.mxu0 0.0
    %290 = vmatprep.subr.mxu0 0.0
    %291 = vmatpush2.msra.mxu0 0.0
    %292 = vmatprep.subr.mxu0 0.0
    %293 = vmatpush2.msra.mxu0 0.0
    %294 = vmatprep.subr.mxu0 0.0
    %295 = vmatpush2.msra.mxu0 0.0
    %296 = vmatprep.subr.mxu0 0.0
    %297 = vmatpush2.msra.mxu0 0.0
    %298 = vmatprep.subr.mxu0 0.0
    %299 = vmatpush2.msra.mxu0 0.0
    %300 = vmatprep.subr.mxu0 0.0
    %301 = vmatpush2.msra.mxu0 0.0
    %302 = vmatprep.subr.mxu0 0.0
    %303 = vmatpush2.msra.mxu0 0.0
    %304 = vmatprep.mubr.f32.mxu0 0.0
    %305 = vmatmul.mubr.f32.gmra.mxu0 %v74
    %v306 = vpop.f32.mrf.mxu0
    %v307 = vadd.f32 %v232, %v306
    %v308 = vpop.f32.mrf.mxu0
    %309 = vmatprep.mubr.f32.mxu0 0.0
    %310 = vmatmul.mubr.f32.gmra.mxu0 %v77
    %v311 = vpop.f32.mrf.mxu0
    %v312 = vadd.f32 %v237, %v311
    %v313 = vpop.f32.mrf.mxu0
    %314 = vdwg.mxu0
    %s315 = scalar_lea.vmem %s0, 16
    %v316 = vld [vmem:[%s315] sm:$0xf]
    %v317 = vld [vmem:[%s315 + $0x4] sm:$0xf]
    %v320 = vunpack.c.l.b16 %v316
    %v321 = vunpack.c.l.b16 %v317
    %v322 = vpack.c.b16 %v321, %v320
    %v324 = vsel %vm35, %v322, 0
    %326 = vmatprep.subr.bf16.mxu0 0
    %327 = vmatpush1.bf16.msra.mxu0 0
    %328 = vmatprep.subr.bf16.mxu0 0
    %329 = vmatpush1.bf16.msra.mxu0 0
    %330 = vmatprep.subr.bf16.mxu0 0
    %331 = vmatpush1.bf16.msra.mxu0 0
    %332 = vmatprep.subr.bf16.mxu0 0
    %333 = vmatpush1.bf16.msra.mxu0 0
    %334 = vmatprep.subr.bf16.mxu0 0
    %335 = vmatpush1.bf16.msra.mxu0 0
    %336 = vmatprep.subr.bf16.mxu0 0
    %337 = vmatpush1.bf16.msra.mxu0 0
    %338 = vmatprep.subr.bf16.mxu0 0
    %339 = vmatpush1.bf16.msra.mxu0 0
    %340 = vmatprep.subr.bf16.mxu0 0
    %341 = vmatpush1.bf16.msra.mxu0 %v27
    %342 = vmatprep.subr.bf16.mxu0 0
    %343 = vmatpush2.bf16.msra.mxu0 0
    %344 = vmatprep.subr.bf16.mxu0 0
    %345 = vmatpush2.bf16.msra.mxu0 0
    %346 = vmatprep.subr.bf16.mxu0 0
    %347 = vmatpush2.bf16.msra.mxu0 0
    %348 = vmatprep.subr.bf16.mxu0 0
    %349 = vmatpush2.bf16.msra.mxu0 0
    %350 = vmatprep.subr.bf16.mxu0 0
    %351 = vmatpush2.bf16.msra.mxu0 0
    %352 = vmatprep.subr.bf16.mxu0 0
    %353 = vmatpush2.bf16.msra.mxu0 0
    %354 = vmatprep.subr.bf16.mxu0 0
    %355 = vmatpush2.bf16.msra.mxu0 0
    %356 = vmatprep.subr.bf16.mxu0 0
    %357 = vmatpush2.bf16.msra.mxu0 0
    %358 = vmatprep.mubr.bf16.mxu0 0
    %359 = vmatmul.mubr.bf16.gmra.mxu0 %v324
    %v360 = vpop.f32.mrf.mxu0
    %v361 = vadd.f32 0.0, %v360
    %v362 = vpop.f32.mrf.mxu0
    %v363 = vpop.f32.mrf.mxu0
    %v364 = vadd.f32 0.0, %v363
    %v365 = vpop.f32.mrf.mxu0
    %366 = vdwg.mxu0
    %s367 = scalar_lea.vmem %s2, 256
    %v368 = vld [vmem:[%s367] sm:$0xff]
    %v369 = vld [vmem:[%s367 + $0x8] sm:$0xff]
    %v370 = vld [vmem:[%s367 + $0x10] sm:$0xff]
    %v371 = vld [vmem:[%s367 + $0x18] sm:$0xff]
    %v372 = vld [vmem:[%s367 + $0x20] sm:$0xff]
    %v373 = vld [vmem:[%s367 + $0x28] sm:$0xff]
    %v374 = vld [vmem:[%s367 + $0x30] sm:$0xff]
    %v375 = vld [vmem:[%s367 + $0x38] sm:$0xff]
    %v376 = vld [vmem:[%s367 + $0x40] sm:$0xff]
    %v377 = vld [vmem:[%s367 + $0x48] sm:$0xff]
    %v378 = vld [vmem:[%s367 + $0x50] sm:$0xff]
    %v379 = vld [vmem:[%s367 + $0x58] sm:$0xff]
    %v380 = vld [vmem:[%s367 + $0x60] sm:$0xff]
    %v381 = vld [vmem:[%s367 + $0x68] sm:$0xff]
    %v382 = vld [vmem:[%s367 + $0x70] sm:$0xff]
    %v383 = vld [vmem:[%s367 + $0x78] sm:$0xff]
    %384 = vmatprep.subr.mxu0 0.0
    %385 = vmatpush1.msra.mxu0 %v383
    %386 = vmatprep.subr.mxu0 0.0
    %387 = vmatpush1.msra.mxu0 %v382
    %388 = vmatprep.subr.mxu0 0.0
    %389 = vmatpush1.msra.mxu0 %v381
    %390 = vmatprep.subr.mxu0 0.0
    %391 = vmatpush1.msra.mxu0 %v380
    %392 = vmatprep.subr.mxu0 0.0
    %393 = vmatpush1.msra.mxu0 %v379
    %394 = vmatprep.subr.mxu0 0.0
    %395 = vmatpush1.msra.mxu0 %v378
    %396 = vmatprep.subr.mxu0 0.0
    %397 = vmatpush1.msra.mxu0 %v377
    %398 = vmatprep.subr.mxu0 0.0
    %399 = vmatpush1.msra.mxu0 %v376
    %400 = vmatprep.subr.mxu0 0.0
    %401 = vmatpush1.msra.mxu0 %v375
    %402 = vmatprep.subr.mxu0 0.0
    %403 = vmatpush1.msra.mxu0 %v374
    %404 = vmatprep.subr.mxu0 0.0
    %405 = vmatpush1.msra.mxu0 %v373
    %406 = vmatprep.subr.mxu0 0.0
    %407 = vmatpush1.msra.mxu0 %v372
    %408 = vmatprep.subr.mxu0 0.0
    %409 = vmatpush1.msra.mxu0 %v371
    %410 = vmatprep.subr.mxu0 0.0
    %411 = vmatpush1.msra.mxu0 %v370
    %412 = vmatprep.subr.mxu0 0.0
    %413 = vmatpush1.msra.mxu0 %v369
    %414 = vmatprep.subr.mxu0 0.0
    %415 = vmatpush1.msra.mxu0 %v368
    %416 = vmatprep.subr.mxu0 0.0
    %417 = vmatpush2.msra.mxu0 0.0
    %418 = vmatprep.subr.mxu0 0.0
    %419 = vmatpush2.msra.mxu0 0.0
    %420 = vmatprep.subr.mxu0 0.0
    %421 = vmatpush2.msra.mxu0 0.0
    %422 = vmatprep.subr.mxu0 0.0
    %423 = vmatpush2.msra.mxu0 0.0
    %424 = vmatprep.subr.mxu0 0.0
    %425 = vmatpush2.msra.mxu0 0.0
    %426 = vmatprep.subr.mxu0 0.0
    %427 = vmatpush2.msra.mxu0 0.0
    %428 = vmatprep.subr.mxu0 0.0
    %429 = vmatpush2.msra.mxu0 0.0
    %430 = vmatprep.subr.mxu0 0.0
    %431 = vmatpush2.msra.mxu0 0.0
    %432 = vmatprep.subr.mxu0 0.0
    %433 = vmatpush2.msra.mxu0 0.0
    %434 = vmatprep.subr.mxu0 0.0
    %435 = vmatpush2.msra.mxu0 0.0
    %436 = vmatprep.subr.mxu0 0.0
    %437 = vmatpush2.msra.mxu0 0.0
    %438 = vmatprep.subr.mxu0 0.0
    %439 = vmatpush2.msra.mxu0 0.0
    %440 = vmatprep.subr.mxu0 0.0
    %441 = vmatpush2.msra.mxu0 0.0
    %442 = vmatprep.subr.mxu0 0.0
    %443 = vmatpush2.msra.mxu0 0.0
    %444 = vmatprep.subr.mxu0 0.0
    %445 = vmatpush2.msra.mxu0 0.0
    %446 = vmatprep.subr.mxu0 0.0
    %447 = vmatpush2.msra.mxu0 0.0
    %448 = vmatprep.mubr.f32.mxu0 0.0
    %449 = vmatmul.mubr.f32.gmra.mxu0 %v361
    %v450 = vpop.f32.mrf.mxu0
    %v451 = vadd.f32 0.0, %v450
    %v452 = vpop.f32.mrf.mxu0
    %453 = vmatprep.mubr.f32.mxu0 0.0
    %454 = vmatmul.mubr.f32.gmra.mxu0 %v364
    %v455 = vpop.f32.mrf.mxu0
    %v456 = vadd.f32 0.0, %v455
    %v457 = vpop.f32.mrf.mxu0
    %458 = vdwg.mxu0
    %v459 = vadd.f32 %v307, %v451
    %v460 = vadd.f32 %v312, %v456
    %v461 = vld [vmem:[%s3] sm:$0x1]
    %v463 = vlaneseq
    %v464 = vshrl.u32 %v463, 7
    %v465 = vsub.s32 0, %v464
    %v466 = vrot.slane %v461, %v465
    %v468 = vadd.f32 %v459, %v466
    %v469 = vadd.f32 %v460, %v466
    %v470 = vmax.f32 %v468, 0.0
    %v471 = vmax.f32 %v469, 0.0
    %v472 = vld [vmem:[%s4] sm:$0xff]
    %v473 = vld [vmem:[%s4 + $0x8] sm:$0xff]
    %v474 = vld [vmem:[%s4 + $0x10] sm:$0xff]
    %v475 = vld [vmem:[%s4 + $0x18] sm:$0xff]
    %v476 = vld [vmem:[%s4 + $0x20] sm:$0xff]
    %v477 = vld [vmem:[%s4 + $0x28] sm:$0xff]
    %v478 = vld [vmem:[%s4 + $0x30] sm:$0xff]
    %v479 = vld [vmem:[%s4 + $0x38] sm:$0xff]
    %v480 = vld [vmem:[%s4 + $0x40] sm:$0xff]
    %v481 = vld [vmem:[%s4 + $0x48] sm:$0xff]
    %v482 = vld [vmem:[%s4 + $0x50] sm:$0xff]
    %v483 = vld [vmem:[%s4 + $0x58] sm:$0xff]
    %v484 = vld [vmem:[%s4 + $0x60] sm:$0xff]
    %v485 = vld [vmem:[%s4 + $0x68] sm:$0xff]
    %v486 = vld [vmem:[%s4 + $0x70] sm:$0xff]
    %v487 = vld [vmem:[%s4 + $0x78] sm:$0xff]
    %488 = vmatprep.subr.mxu0 0.0
    %489 = vmatpush1.msra.mxu0 %v487
    %490 = vmatprep.subr.mxu0 0.0
    %491 = vmatpush1.msra.mxu0 %v486
    %492 = vmatprep.subr.mxu0 0.0
    %493 = vmatpush1.msra.mxu0 %v485
    %494 = vmatprep.subr.mxu0 0.0
    %495 = vmatpush1.msra.mxu0 %v484
    %496 = vmatprep.subr.mxu0 0.0
    %497 = vmatpush1.msra.mxu0 %v483
    %498 = vmatprep.subr.mxu0 0.0
    %499 = vmatpush1.msra.mxu0 %v482
    %500 = vmatprep.subr.mxu0 0.0
    %501 = vmatpush1.msra.mxu0 %v481
    %502 = vmatprep.subr.mxu0 0.0
    %503 = vmatpush1.msra.mxu0 %v480
    %504 = vmatprep.subr.mxu0 0.0
    %505 = vmatpush1.msra.mxu0 %v479
    %506 = vmatprep.subr.mxu0 0.0
    %507 = vmatpush1.msra.mxu0 %v478
    %508 = vmatprep.subr.mxu0 0.0
    %509 = vmatpush1.msra.mxu0 %v477
    %510 = vmatprep.subr.mxu0 0.0
    %511 = vmatpush1.msra.mxu0 %v476
    %512 = vmatprep.subr.mxu0 0.0
    %513 = vmatpush1.msra.mxu0 %v475
    %514 = vmatprep.subr.mxu0 0.0
    %515 = vmatpush1.msra.mxu0 %v474
    %516 = vmatprep.subr.mxu0 0.0
    %517 = vmatpush1.msra.mxu0 %v473
    %518 = vmatprep.subr.mxu0 0.0
    %519 = vmatpush1.msra.mxu0 %v472
    %520 = vmatprep.subr.mxu0 0.0
    %521 = vmatpush2.msra.mxu0 0.0
    %522 = vmatprep.subr.mxu0 0.0
    %523 = vmatpush2.msra.mxu0 0.0
    %524 = vmatprep.subr.mxu0 0.0
    %525 = vmatpush2.msra.mxu0 0.0
    %526 = vmatprep.subr.mxu0 0.0
    %527 = vmatpush2.msra.mxu0 0.0
    %528 = vmatprep.subr.mxu0 0.0
    %529 = vmatpush2.msra.mxu0 0.0
    %530 = vmatprep.subr.mxu0 0.0
    %531 = vmatpush2.msra.mxu0 0.0
    %532 = vmatprep.subr.mxu0 0.0
    %533 = vmatpush2.msra.mxu0 0.0
    %534 = vmatprep.subr.mxu0 0.0
    %535 = vmatpush2.msra.mxu0 0.0
    %536 = vmatprep.subr.mxu0 0.0
    %537 = vmatpush2.msra.mxu0 0.0
    %538 = vmatprep.subr.mxu0 0.0
    %539 = vmatpush2.msra.mxu0 0.0
    %540 = vmatprep.subr.mxu0 0.0
    %541 = vmatpush2.msra.mxu0 0.0
    %542 = vmatprep.subr.mxu0 0.0
    %543 = vmatpush2.msra.mxu0 0.0
    %544 = vmatprep.subr.mxu0 0.0
    %545 = vmatpush2.msra.mxu0 0.0
    %546 = vmatprep.subr.mxu0 0.0
    %547 = vmatpush2.msra.mxu0 0.0
    %548 = vmatprep.subr.mxu0 0.0
    %549 = vmatpush2.msra.mxu0 0.0
    %550 = vmatprep.subr.mxu0 0.0
    %551 = vmatpush2.msra.mxu0 0.0
    %552 = vmatprep.mubr.f32.mxu0 0.0
    %553 = vmatmul.mubr.f32.gmra.mxu0 %v470
    %v554 = vpop.f32.mrf.mxu0
    %v555 = vadd.f32 0.0, %v554
    %v556 = vpop.f32.mrf.mxu0
    %557 = vmatprep.mubr.f32.mxu0 0.0
    %558 = vmatmul.mubr.f32.gmra.mxu0 %v471
    %v559 = vpop.f32.mrf.mxu0
    %v560 = vadd.f32 0.0, %v559
    %v561 = vpop.f32.mrf.mxu0
    %562 = vdwg.mxu0
    %v563 = vpack.c.bf16 %v560, %v555
    %s564 = scalar_lea.vmem %s4, 128
    %v565 = vld [vmem:[%s564] sm:$0xff]
    %v566 = vld [vmem:[%s564 + $0x8] sm:$0xff]
    %v567 = vld [vmem:[%s564 + $0x10] sm:$0xff]
    %v568 = vld [vmem:[%s564 + $0x18] sm:$0xff]
    %v569 = vld [vmem:[%s564 + $0x20] sm:$0xff]
    %v570 = vld [vmem:[%s564 + $0x28] sm:$0xff]
    %v571 = vld [vmem:[%s564 + $0x30] sm:$0xff]
    %v572 = vld [vmem:[%s564 + $0x38] sm:$0xff]
    %v573 = vld [vmem:[%s564 + $0x40] sm:$0xff]
    %v574 = vld [vmem:[%s564 + $0x48] sm:$0xff]
    %v575 = vld [vmem:[%s564 + $0x50] sm:$0xff]
    %v576 = vld [vmem:[%s564 + $0x58] sm:$0xff]
    %v577 = vld [vmem:[%s564 + $0x60] sm:$0xff]
    %v578 = vld [vmem:[%s564 + $0x68] sm:$0xff]
    %v579 = vld [vmem:[%s564 + $0x70] sm:$0xff]
    %v580 = vld [vmem:[%s564 + $0x78] sm:$0xff]
    %581 = vmatprep.subr.mxu0 0.0
    %582 = vmatpush1.msra.mxu0 %v580
    %583 = vmatprep.subr.mxu0 0.0
    %584 = vmatpush1.msra.mxu0 %v579
    %585 = vmatprep.subr.mxu0 0.0
    %586 = vmatpush1.msra.mxu0 %v578
    %587 = vmatprep.subr.mxu0 0.0
    %588 = vmatpush1.msra.mxu0 %v577
    %589 = vmatprep.subr.mxu0 0.0
    %590 = vmatpush1.msra.mxu0 %v576
    %591 = vmatprep.subr.mxu0 0.0
    %592 = vmatpush1.msra.mxu0 %v575
    %593 = vmatprep.subr.mxu0 0.0
    %594 = vmatpush1.msra.mxu0 %v574
    %595 = vmatprep.subr.mxu0 0.0
    %596 = vmatpush1.msra.mxu0 %v573
    %597 = vmatprep.subr.mxu0 0.0
    %598 = vmatpush1.msra.mxu0 %v572
    %599 = vmatprep.subr.mxu0 0.0
    %600 = vmatpush1.msra.mxu0 %v571
    %601 = vmatprep.subr.mxu0 0.0
    %602 = vmatpush1.msra.mxu0 %v570
    %603 = vmatprep.subr.mxu0 0.0
    %604 = vmatpush1.msra.mxu0 %v569
    %605 = vmatprep.subr.mxu0 0.0
    %606 = vmatpush1.msra.mxu0 %v568
    %607 = vmatprep.subr.mxu0 0.0
    %608 = vmatpush1.msra.mxu0 %v567
    %609 = vmatprep.subr.mxu0 0.0
    %610 = vmatpush1.msra.mxu0 %v566
    %611 = vmatprep.subr.mxu0 0.0
    %612 = vmatpush1.msra.mxu0 %v565
    %613 = vmatprep.subr.mxu0 0.0
    %614 = vmatpush2.msra.mxu0 0.0
    %615 = vmatprep.subr.mxu0 0.0
    %616 = vmatpush2.msra.mxu0 0.0
    %617 = vmatprep.subr.mxu0 0.0
    %618 = vmatpush2.msra.mxu0 0.0
    %619 = vmatprep.subr.mxu0 0.0
    %620 = vmatpush2.msra.mxu0 0.0
    %621 = vmatprep.subr.mxu0 0.0
    %622 = vmatpush2.msra.mxu0 0.0
    %623 = vmatprep.subr.mxu0 0.0
    %624 = vmatpush2.msra.mxu0 0.0
    %625 = vmatprep.subr.mxu0 0.0
    %626 = vmatpush2.msra.mxu0 0.0
    %627 = vmatprep.subr.mxu0 0.0
    %628 = vmatpush2.msra.mxu0 0.0
    %629 = vmatprep.subr.mxu0 0.0
    %630 = vmatpush2.msra.mxu0 0.0
    %631 = vmatprep.subr.mxu0 0.0
    %632 = vmatpush2.msra.mxu0 0.0
    %633 = vmatprep.subr.mxu0 0.0
    %634 = vmatpush2.msra.mxu0 0.0
    %635 = vmatprep.subr.mxu0 0.0
    %636 = vmatpush2.msra.mxu0 0.0
    %637 = vmatprep.subr.mxu0 0.0
    %638 = vmatpush2.msra.mxu0 0.0
    %639 = vmatprep.subr.mxu0 0.0
    %640 = vmatpush2.msra.mxu0 0.0
    %641 = vmatprep.subr.mxu0 0.0
    %642 = vmatpush2.msra.mxu0 0.0
    %643 = vmatprep.subr.mxu0 0.0
    %644 = vmatpush2.msra.mxu0 0.0
    %645 = vmatprep.mubr.f32.mxu0 0.0
    %646 = vmatmul.mubr.f32.gmra.mxu0 %v470
    %v647 = vpop.f32.mrf.mxu0
    %v648 = vadd.f32 0.0, %v647
    %v649 = vpop.f32.mrf.mxu0
    %650 = vmatprep.mubr.f32.mxu0 0.0
    %651 = vmatmul.mubr.f32.gmra.mxu0 %v471
    %v652 = vpop.f32.mrf.mxu0
    %v653 = vadd.f32 0.0, %v652
    %v654 = vpop.f32.mrf.mxu0
    %655 = vdwg.mxu0
    %v656 = vpack.c.bf16 %v653, %v648
    %657 = vmatprep.subr.bf16.mxu0 0
    %658 = vmatpush1.bf16.msra.mxu0 0
    %659 = vmatprep.subr.bf16.mxu0 0
    %660 = vmatpush1.bf16.msra.mxu0 0
    %661 = vmatprep.subr.bf16.mxu0 0
    %662 = vmatpush1.bf16.msra.mxu0 0
    %663 = vmatprep.subr.bf16.mxu0 0
    %664 = vmatpush1.bf16.msra.mxu0 0
    %665 = vmatprep.subr.bf16.mxu0 0
    %666 = vmatpush1.bf16.msra.mxu0 0
    %667 = vmatprep.subr.bf16.mxu0 0
    %668 = vmatpush1.bf16.msra.mxu0 0
    %669 = vmatprep.subr.bf16.mxu0 0
    %670 = vmatpush1.bf16.msra.mxu0 0
    %671 = vmatprep.subr.bf16.mxu0 0
    %672 = vmatpush1.bf16.msra.mxu0 %v656
    %673 = vmatprep.subr.bf16.mxu0 0
    %674 = vmatpush2.bf16.msra.mxu0 0
    %675 = vmatprep.subr.bf16.mxu0 0
    %676 = vmatpush2.bf16.msra.mxu0 0
    %677 = vmatprep.subr.bf16.mxu0 0
    %678 = vmatpush2.bf16.msra.mxu0 0
    %679 = vmatprep.subr.bf16.mxu0 0
    %680 = vmatpush2.bf16.msra.mxu0 0
    %681 = vmatprep.subr.bf16.mxu0 0
    %682 = vmatpush2.bf16.msra.mxu0 0
    %683 = vmatprep.subr.bf16.mxu0 0
    %684 = vmatpush2.bf16.msra.mxu0 0
    %685 = vmatprep.subr.bf16.mxu0 0
    %686 = vmatpush2.bf16.msra.mxu0 0
    %687 = vmatprep.subr.bf16.mxu0 0
    %688 = vmatpush2.bf16.msra.mxu0 0
    %689 = vmatprep.mubr.bf16.mxu0 0
    %690 = vmatmul.mubr.bf16.gmra.mxu0 %v105
    %v691 = vpop.f32.mrf.mxu0
    %v692 = vadd.f32 0.0, %v691
    %v693 = vpop.f32.mrf.mxu0
    %v694 = vpop.f32.mrf.mxu0
    %v695 = vadd.f32 0.0, %v694
    %v696 = vpop.f32.mrf.mxu0
    %697 = vdwg.mxu0
    %698 = vmatprep.subr.bf16.mxu0 0
    %699 = vmatpush1.bf16.msra.mxu0 0
    %700 = vmatprep.subr.bf16.mxu0 0
    %701 = vmatpush1.bf16.msra.mxu0 0
    %702 = vmatprep.subr.bf16.mxu0 0
    %703 = vmatpush1.bf16.msra.mxu0 0
    %704 = vmatprep.subr.bf16.mxu0 0
    %705 = vmatpush1.bf16.msra.mxu0 0
    %706 = vmatprep.subr.bf16.mxu0 0
    %707 = vmatpush1.bf16.msra.mxu0 0
    %708 = vmatprep.subr.bf16.mxu0 0
    %709 = vmatpush1.bf16.msra.mxu0 0
    %710 = vmatprep.subr.bf16.mxu0 0
    %711 = vmatpush1.bf16.msra.mxu0 0
    %712 = vmatprep.subr.bf16.mxu0 0
    %713 = vmatpush1.bf16.msra.mxu0 %v563
    %714 = vmatprep.subr.bf16.mxu0 0
    %715 = vmatpush2.bf16.msra.mxu0 0
    %716 = vmatprep.subr.bf16.mxu0 0
    %717 = vmatpush2.bf16.msra.mxu0 0
    %718 = vmatprep.subr.bf16.mxu0 0
    %719 = vmatpush2.bf16.msra.mxu0 0
    %720 = vmatprep.subr.bf16.mxu0 0
    %721 = vmatpush2.bf16.msra.mxu0 0
    %722 = vmatprep.subr.bf16.mxu0 0
    %723 = vmatpush2.bf16.msra.mxu0 0
    %724 = vmatprep.subr.bf16.mxu0 0
    %725 = vmatpush2.bf16.msra.mxu0 0
    %726 = vmatprep.subr.bf16.mxu0 0
    %727 = vmatpush2.bf16.msra.mxu0 0
    %728 = vmatprep.subr.bf16.mxu0 0
    %729 = vmatpush2.bf16.msra.mxu0 0
    %730 = vmatprep.mubr.bf16.mxu0 0
    %731 = vmatmul.mubr.bf16.gmra.mxu0 %v37
    %v732 = vpop.f32.mrf.mxu0
    %v733 = vadd.f32 %v692, %v732
    %v734 = vpop.f32.mrf.mxu0
    %v735 = vpop.f32.mrf.mxu0
    %v736 = vadd.f32 %v695, %v735
    %v737 = vpop.f32.mrf.mxu0
    %738 = vdwg.mxu0
    %s739 = scalar_lea.vmem %s4, 256
    %v740 = vld [vmem:[%s739] sm:$0xff]
    %v741 = vld [vmem:[%s739 + $0x8] sm:$0xff]
    %v742 = vld [vmem:[%s739 + $0x10] sm:$0xff]
    %v743 = vld [vmem:[%s739 + $0x18] sm:$0xff]
    %v744 = vld [vmem:[%s739 + $0x20] sm:$0xff]
    %v745 = vld [vmem:[%s739 + $0x28] sm:$0xff]
    %v746 = vld [vmem:[%s739 + $0x30] sm:$0xff]
    %v747 = vld [vmem:[%s739 + $0x38] sm:$0xff]
    %v748 = vld [vmem:[%s739 + $0x40] sm:$0xff]
    %v749 = vld [vmem:[%s739 + $0x48] sm:$0xff]
    %v750 = vld [vmem:[%s739 + $0x50] sm:$0xff]
    %v751 = vld [vmem:[%s739 + $0x58] sm:$0xff]
    %v752 = vld [vmem:[%s739 + $0x60] sm:$0xff]
    %v753 = vld [vmem:[%s739 + $0x68] sm:$0xff]
    %v754 = vld [vmem:[%s739 + $0x70] sm:$0xff]
    %v755 = vld [vmem:[%s739 + $0x78] sm:$0xff]
    %756 = vmatprep.subr.mxu0 0.0
    %757 = vmatpush1.msra.mxu0 %v755
    %758 = vmatprep.subr.mxu0 0.0
    %759 = vmatpush1.msra.mxu0 %v754
    %760 = vmatprep.subr.mxu0 0.0
    %761 = vmatpush1.msra.mxu0 %v753
    %762 = vmatprep.subr.mxu0 0.0
    %763 = vmatpush1.msra.mxu0 %v752
    %764 = vmatprep.subr.mxu0 0.0
    %765 = vmatpush1.msra.mxu0 %v751
    %766 = vmatprep.subr.mxu0 0.0
    %767 = vmatpush1.msra.mxu0 %v750
    %768 = vmatprep.subr.mxu0 0.0
    %769 = vmatpush1.msra.mxu0 %v749
    %770 = vmatprep.subr.mxu0 0.0
    %771 = vmatpush1.msra.mxu0 %v748
    %772 = vmatprep.subr.mxu0 0.0
    %773 = vmatpush1.msra.mxu0 %v747
    %774 = vmatprep.subr.mxu0 0.0
    %775 = vmatpush1.msra.mxu0 %v746
    %776 = vmatprep.subr.mxu0 0.0
    %777 = vmatpush1.msra.mxu0 %v745
    %778 = vmatprep.subr.mxu0 0.0
    %779 = vmatpush1.msra.mxu0 %v744
    %780 = vmatprep.subr.mxu0 0.0
    %781 = vmatpush1.msra.mxu0 %v743
    %782 = vmatprep.subr.mxu0 0.0
    %783 = vmatpush1.msra.mxu0 %v742
    %784 = vmatprep.subr.mxu0 0.0
    %785 = vmatpush1.msra.mxu0 %v741
    %786 = vmatprep.subr.mxu0 0.0
    %787 = vmatpush1.msra.mxu0 %v740
    %788 = vmatprep.subr.mxu0 0.0
    %789 = vmatpush2.msra.mxu0 0.0
    %790 = vmatprep.subr.mxu0 0.0
    %791 = vmatpush2.msra.mxu0 0.0
    %792 = vmatprep.subr.mxu0 0.0
    %793 = vmatpush2.msra.mxu0 0.0
    %794 = vmatprep.subr.mxu0 0.0
    %795 = vmatpush2.msra.mxu0 0.0
    %796 = vmatprep.subr.mxu0 0.0
    %797 = vmatpush2.msra.mxu0 0.0
    %798 = vmatprep.subr.mxu0 0.0
    %799 = vmatpush2.msra.mxu0 0.0
    %800 = vmatprep.subr.mxu0 0.0
    %801 = vmatpush2.msra.mxu0 0.0
    %802 = vmatprep.subr.mxu0 0.0
    %803 = vmatpush2.msra.mxu0 0.0
    %804 = vmatprep.subr.mxu0 0.0
    %805 = vmatpush2.msra.mxu0 0.0
    %806 = vmatprep.subr.mxu0 0.0
    %807 = vmatpush2.msra.mxu0 0.0
    %808 = vmatprep.subr.mxu0 0.0
    %809 = vmatpush2.msra.mxu0 0.0
    %810 = vmatprep.subr.mxu0 0.0
    %811 = vmatpush2.msra.mxu0 0.0
    %812 = vmatprep.subr.mxu0 0.0
    %813 = vmatpush2.msra.mxu0 0.0
    %814 = vmatprep.subr.mxu0 0.0
    %815 = vmatpush2.msra.mxu0 0.0
    %816 = vmatprep.subr.mxu0 0.0
    %817 = vmatpush2.msra.mxu0 0.0
    %818 = vmatprep.subr.mxu0 0.0
    %819 = vmatpush2.msra.mxu0 0.0
    %820 = vmatprep.mubr.f32.mxu0 0.0
    %821 = vmatmul.mubr.f32.gmra.mxu0 %v470
    %v822 = vpop.f32.mrf.mxu0
    %v823 = vadd.f32 0.0, %v822
    %v824 = vpop.f32.mrf.mxu0
    %825 = vmatprep.mubr.f32.mxu0 0.0
    %826 = vmatmul.mubr.f32.gmra.mxu0 %v471
    %v827 = vpop.f32.mrf.mxu0
    %v828 = vadd.f32 0.0, %v827
    %v829 = vpop.f32.mrf.mxu0
    %830 = vdwg.mxu0
    %v831 = vpack.c.bf16 %v828, %v823
    %832 = vmatprep.subr.bf16.mxu0 0
    %833 = vmatpush1.bf16.msra.mxu0 0
    %834 = vmatprep.subr.bf16.mxu0 0
    %835 = vmatpush1.bf16.msra.mxu0 0
    %836 = vmatprep.subr.bf16.mxu0 0
    %837 = vmatpush1.bf16.msra.mxu0 0
    %838 = vmatprep.subr.bf16.mxu0 0
    %839 = vmatpush1.bf16.msra.mxu0 0
    %840 = vmatprep.subr.bf16.mxu0 0
    %841 = vmatpush1.bf16.msra.mxu0 0
    %842 = vmatprep.subr.bf16.mxu0 0
    %843 = vmatpush1.bf16.msra.mxu0 0
    %844 = vmatprep.subr.bf16.mxu0 0
    %845 = vmatpush1.bf16.msra.mxu0 0
    %846 = vmatprep.subr.bf16.mxu0 0
    %847 = vmatpush1.bf16.msra.mxu0 %v831
    %848 = vmatprep.subr.bf16.mxu0 0
    %849 = vmatpush2.bf16.msra.mxu0 0
    %850 = vmatprep.subr.bf16.mxu0 0
    %851 = vmatpush2.bf16.msra.mxu0 0
    %852 = vmatprep.subr.bf16.mxu0 0
    %853 = vmatpush2.bf16.msra.mxu0 0
    %854 = vmatprep.subr.bf16.mxu0 0
    %855 = vmatpush2.bf16.msra.mxu0 0
    %856 = vmatprep.subr.bf16.mxu0 0
    %857 = vmatpush2.bf16.msra.mxu0 0
    %858 = vmatprep.subr.bf16.mxu0 0
    %859 = vmatpush2.bf16.msra.mxu0 0
    %860 = vmatprep.subr.bf16.mxu0 0
    %861 = vmatpush2.bf16.msra.mxu0 0
    %862 = vmatprep.subr.bf16.mxu0 0
    %863 = vmatpush2.bf16.msra.mxu0 0
    %864 = vmatprep.mubr.bf16.mxu0 0
    %865 = vmatmul.mubr.bf16.gmra.mxu0 %v324
    %v866 = vpop.f32.mrf.mxu0
    %v867 = vadd.f32 0.0, %v866
    %v868 = vpop.f32.mrf.mxu0
    %v869 = vpop.f32.mrf.mxu0
    %v870 = vadd.f32 0.0, %v869
    %v871 = vpop.f32.mrf.mxu0
    %872 = vdwg.mxu0
    %v873 = vadd.f32 %v733, %v867
    %v874 = vadd.f32 %v736, %v870
    %v875 = vld [vmem:[%s5] sm:$0x1]
    %v877 = vlaneseq
    %v878 = vshrl.u32 %v877, 7
    %v879 = vsub.s32 0, %v878
    %v880 = vrot.slane %v875, %v879
    %v882 = vadd.f32 %v873, %v880
    %v883 = vadd.f32 %v874, %v880
    %884 = vst [vmem:[#allocation2] sm:$0xff] %v882
    %885 = vst [vmem:[#allocation2 + $0x8] sm:$0xff] %v883
    // Predicated region
    $region26: #{rgcn_forward.1} parent=1 // pred_check
      _
    $region27: #{rgcn_forward.1} parent=1 // pred_check_branch
      %887 = sbr.rel (0) target = $region29
    $region28: #{rgcn_forward.1} parent=1 // pred_region
      %s889 = ssub.s32 256, 256
      %890 = vsyncadd [#allocation3], %s889
      %s891 = sshll.u32 [#allocation2], 4
      %s892 = int_to_ptr.vmem [resolvable:$true] %s891
      %897 = dma.vmem_to_hbm [thread:$0]  %s892, 256, %s6, [#allocation3], 128, 128, 8
    $region29: #{rgcn_forward.1} parent=1 // pred_fallthru
      _
    // Predicated region
    $region30: #{rgcn_forward.1} parent=1 // pred_check
      _
    $region31: #{rgcn_forward.1} parent=1 // pred_check_branch
      %899 = sbr.rel (0) target = $region33
    $region32: #{rgcn_forward.1} parent=1 // pred_region
      %900 = dma.done [#allocation3], 256
    $region33: #{rgcn_forward.1} parent=1 // pred_fallthru
      _
    %901 = vsyncpa [#allocation3], 1

</llo_original>
